<compile_context>
chip_gen: v5e
topology: v5e:2x2
jax: 0.10.0
libtpu: 0.0.40
codegen_flags: <defaults>
</compile_context>

<pallas_src>
import jax
import jax.numpy as jnp
from jax.experimental import pallas as pl
from jax.experimental.pallas import tpu as pltpu

LANE = 128
_MAX_LANES = 8192                     # cap on lane-axis tile width
_BLOCK_BYTES = 6 * 1024 * 1024        # per x/out block (2x in + 2x out ~ 24 MiB)
_VMEM_LIMIT = 40 * 1024 * 1024        # scoped VMEM request; < 64 MiB (v7x physical)


# ---------------------------------------------------------------------------
# Streaming kernel: out = x * scale + shift   (pure VPU, HBM-bandwidth bound)
# ---------------------------------------------------------------------------
def _film_mod_kernel(scale_ref, shift_ref, x_ref, o_ref):
    # scale_ref / shift_ref: (Ct, 1)  -- per-channel, lane-broadcast on the VPU
    # x_ref / o_ref:         (Ct, Lt) -- batch dim squeezed away
    o_ref[...] = (x_ref[...] * scale_ref[...] + shift_ref[...]).astype(o_ref.dtype)


# ---------------------------------------------------------------------------
# Tile selection
# ---------------------------------------------------------------------------
def _round_down(v, m):
    return (v // m) * m


def _round_up(v, m):
    return ((v + m - 1) // m) * m


def _sublane_multiple(dtype):
    itemsize = jnp.dtype(dtype).itemsize
    if itemsize >= 4:
        return 8
    if itemsize == 2:
        return 16
    return 32


def _pick_tiles(C, L, dtype):
    """Lane-dense Lt first (contiguous HBM axis), then Ct fills the budget."""
    itemsize = jnp.dtype(dtype).itemsize
    sub = _sublane_multiple(dtype)
    max_elems = max(sub * LANE, _BLOCK_BYTES // itemsize)

    # Lane axis: largest multiple of 128 (up to 8192 / budget); full extent if
    # L < 128 (legal because block dim == array dim).
    if L <= LANE:
        Lt = L
    else:
        Lt = min(_round_down(L, LANE), _MAX_LANES,
                 max(LANE, _round_down(max_elems // sub, LANE)))

    # Sublane axis: multiple of the dtype packing (ragged tail masked), or the
    # full extent for tiny C.
    if C <= sub:
        Ct = C
    else:
        Ct = min(C, max(sub, _round_down(max_elems // Lt, sub)))
        if Ct < C:
            Ct = max(sub, _round_down(Ct, sub))
    return Ct, Lt, sub


def _ensure_multiple_blocks(B, C, L, Ct, Lt, sub):
    """Keep >= 2 grid points so both v7x TensorCores get work."""
    if B * pl.cdiv(C, Ct) * pl.cdiv(L, Lt) >= 2:
        return Ct, Lt
    if L >= 2 * LANE:
        Lt = min(Lt, _round_up(pl.cdiv(L, 2), LANE))
    elif C >= 2 * sub:
        Ct = min(Ct, _round_up(pl.cdiv(C, 2), sub))
    return Ct, Lt


# ---------------------------------------------------------------------------
# FiLM forward
# ---------------------------------------------------------------------------
def film(x, z, w_scale, b_scale, w_shift, b_shift):
    """FiLM forward.

    x: (B, C, L); z: (B, F).
    w_*: (C, F) in torch.nn.Linear convention; b_*: (C,).
    """
    B, C, L = x.shape

    # Tiny fused projection left to XLA (fuses concat + transpose + GEMM);
    # f32 accumulation, then cast modulation params to x.dtype so the
    # streaming FMA runs in x's dtype (bf16 VALU on v6e/v7x).
    w_cat = jnp.concatenate([w_scale, w_shift], axis=0).astype(jnp.float32)  # (2C, F)
    b_cat = jnp.concatenate([b_scale, b_shift]).astype(jnp.float32)          # (2C,)
    sh = jnp.dot(z.astype(jnp.float32), w_cat.T,
                 preferred_element_type=jnp.float32) + b_cat                 # (B, 2C)
    scale = sh[:, :C].astype(x.dtype).reshape(B, C, 1)
    shift = sh[:, C:].astype(x.dtype).reshape(B, C, 1)

    # Tiling for the streaming kernel (ragged tails masked by Pallas).
    Ct, Lt, sub = _pick_tiles(C, L, x.dtype)
    Ct, Lt = _ensure_multiple_blocks(B, C, L, Ct, Lt, sub)
    grid = (B, pl.cdiv(C, Ct), pl.cdiv(L, Lt))

    return pl.pallas_call(
        _film_mod_kernel,
        out_shape=jax.ShapeDtypeStruct((B, C, L), x.dtype),
        grid=grid,
        in_specs=[
            pl.BlockSpec((pl.Squeezed(), Ct, 1), lambda b, c, l: (b, c, 0)),   # scale
            pl.BlockSpec((pl.Squeezed(), Ct, 1), lambda b, c, l: (b, c, 0)),   # shift
            pl.BlockSpec((pl.Squeezed(), Ct, Lt), lambda b, c, l: (b, c, l)),  # x
        ],
        out_specs=pl.BlockSpec((pl.Squeezed(), Ct, Lt), lambda b, c, l: (b, c, l)),
        compiler_params=pltpu.CompilerParams(
            dimension_semantics=("parallel", "parallel", "parallel"),
            vmem_limit_bytes=_VMEM_LIMIT),
    )(scale, shift, x)


if __name__ == "__main__":
    # Small shapes consistent with the module's forward.
    B, C, L, F = 2, 4, 16, 32   # batch, num_features, spatial length, film_dim

    key = jax.random.PRNGKey(0)
    kx, kz, kws, kbs, kwh, kbh = jax.random.split(key, 6)

    x = jax.random.normal(kx, (B, C, L), dtype=jnp.float32)
    z = jax.random.normal(kz, (B, F), dtype=jnp.float32)

    # Deterministic nn.Linear-style init: U(-1/sqrt(F), 1/sqrt(F))
    bound = 1.0 / (F ** 0.5)
    w_scale = jax.random.uniform(kws, (C, F), jnp.float32, -bound, bound)
    b_scale = jax.random.uniform(kbs, (C,), jnp.float32, -bound, bound)
    w_shift = jax.random.uniform(kwh, (C, F), jnp.float32, -bound, bound)
    b_shift = jax.random.uniform(kbh, (C,), jnp.float32, -bound, bound)

    out = jax.block_until_ready(film(x, z, w_scale, b_scale, w_shift, b_shift))

    # Pure-JAX reference check.
    scale_ref = (z @ w_scale.T + b_scale)[:, :, None]
    shift_ref = (z @ w_shift.T + b_shift)[:, :, None]
    ref = x * scale_ref + shift_ref
    assert out.shape == (B, C, L)
    assert jnp.allclose(out, ref, atol=1e-5, rtol=1e-5), "mismatch vs reference"

    print("KERNEL_OK")
</pallas_src>

<mosaic_0001>
module attributes {stable_mosaic.version = 11 : i64} {
  func.func @_film_mod_kernel(%arg0: i32, %arg1: i32, %arg2: i32, %arg3: memref<1x4x1xf32, #tpu.memory_space<vmem>>, %arg4: memref<1x4x1xf32, #tpu.memory_space<vmem>>, %arg5: memref<1x4x16xf32, #tpu.memory_space<vmem>>, %arg6: memref<1x4x16xf32, #tpu.memory_space<vmem>>) attributes {dimension_semantics = [#tpu.dimension_semantics<parallel>, #tpu.dimension_semantics<parallel>, #tpu.dimension_semantics<parallel>], iteration_bounds = array<i64: 2, 1, 1>, scalar_prefetch = 0 : i64, scratch_operands = 0 : i64, tpu.core_type = #tpu.core_type<tc>, window_params = [{transform_indices = @transform_0, window_bounds = array<i64: 1, 4, 1>}, {transform_indices = @transform_1, window_bounds = array<i64: 1, 4, 1>}, {transform_indices = @transform_2, window_bounds = array<i64: 1, 4, 16>}, {transform_indices = @transform_3, window_bounds = array<i64: 1, 4, 16>}]} {
    %c0 = arith.constant 0 : index
    %c0_0 = arith.constant 0 : index
    %c0_1 = arith.constant 0 : index
    %0 = vector.load %arg5[%c0, %c0_0, %c0_1] : memref<1x4x16xf32, #tpu.memory_space<vmem>>, vector<1x4x16xf32>
    %1 = vector.shape_cast %0 : vector<1x4x16xf32> to vector<4x16xf32>
    %c0_2 = arith.constant 0 : index
    %c0_3 = arith.constant 0 : index
    %c0_4 = arith.constant 0 : index
    %2 = vector.load %arg3[%c0_2, %c0_3, %c0_4] : memref<1x4x1xf32, #tpu.memory_space<vmem>>, vector<1x4x1xf32>
    %3 = vector.shape_cast %2 : vector<1x4x1xf32> to vector<4x1xf32>
    %4 = vector.broadcast %3 : vector<4x1xf32> to vector<4x16xf32>
    %5 = arith.mulf %1, %4 : vector<4x16xf32>
    %c0_5 = arith.constant 0 : index
    %c0_6 = arith.constant 0 : index
    %c0_7 = arith.constant 0 : index
    %6 = vector.load %arg4[%c0_5, %c0_6, %c0_7] : memref<1x4x1xf32, #tpu.memory_space<vmem>>, vector<1x4x1xf32>
    %7 = vector.shape_cast %6 : vector<1x4x1xf32> to vector<4x1xf32>
    %8 = vector.broadcast %7 : vector<4x1xf32> to vector<4x16xf32>
    %9 = arith.addf %5, %8 : vector<4x16xf32>
    %c0_8 = arith.constant 0 : index
    %c0_9 = arith.constant 0 : index
    %c0_10 = arith.constant 0 : index
    %10 = vector.load %arg6[%c0_8, %c0_9, %c0_10] : memref<1x4x16xf32, #tpu.memory_space<vmem>>, vector<1x4x16xf32>
    %11 = vector.shape_cast %10 : vector<1x4x16xf32> to vector<4x16xf32>
    %12 = vector.shape_cast %9 : vector<4x16xf32> to vector<1x4x16xf32>
    tpu.vector_store %arg6[%c0_8, %c0_9, %c0_10], %12 {strides = array<i32>} : memref<1x4x16xf32, #tpu.memory_space<vmem>>, vector<1x4x16xf32>,
    return
  }
  func.func @transform_0(%arg0: i32, %arg1: i32, %arg2: i32) -> (i32, i32, i32) {
    %c0_i32 = arith.constant 0 : i32
    %c0_i32_0 = arith.constant 0 : i32
    return %arg0, %arg1, %c0_i32 : i32, i32, i32
  }
  func.func @transform_1(%arg0: i32, %arg1: i32, %arg2: i32) -> (i32, i32, i32) {
    %c0_i32 = arith.constant 0 : i32
    %c0_i32_0 = arith.constant 0 : i32
    return %arg0, %arg1, %c0_i32 : i32, i32, i32
  }
  func.func @transform_2(%arg0: i32, %arg1: i32, %arg2: i32) -> (i32, i32, i32) {
    %c0_i32 = arith.constant 0 : i32
    return %arg0, %arg1, %arg2 : i32, i32, i32
  }
  func.func @transform_3(%arg0: i32, %arg1: i32, %arg2: i32) -> (i32, i32, i32) {
    %c0_i32 = arith.constant 0 : i32
    return %arg0, %arg1, %arg2 : i32, i32, i32
  }
}

</mosaic_0001>

<llo_original>
// kernel: tpu_custom_call.1
$region0: #{tpu_custom_call.1}
  #allocation0 [shape = 'u32[]', space=smem, size = 0x4, offset = 0x4, fixed_abs, tag = 'smem constant byte address 0x4 - core index']
  #allocation1 [shape = 'u32[72,128]{1,0:T(1,128)}', space=vmem, size = 0x9000, scoped, tag = 'internal scratch']
  %s0 = inlined_call_operand.vmem [shape: f32[2,4,1], index: 0, kind: input, shape index: {}]
  %s1 = inlined_call_operand.vmem [shape: f32[2,4,1], index: 1, kind: input, shape index: {}]
  %s2 = inlined_call_operand.vmem [shape: f32[2,4,16], index: 2, kind: input, shape index: {}]
  %s3 = inlined_call_operand.hbm [shape: f32[2,4,16], index: 3, kind: output, shape index: {}]
  %s4 = sld [smem:[#allocation0]]
  $region45: #{tpu_custom_call.1} parent=0
    _
  %s6 = ssub.s32 1, %s4
  %s7 = scalar_select 0, %s6, %s4
  $region1: #{tpu_custom_call.1} parent=0
    #allocation2 [shape = 'u8[4096]{0}', space=vmem, size = 0x1000, scoped, tag = 'output window, operand 0']
    #allocation3 [shape = 's32[2]{0}', space=sflag, size = 0x8, scoped, tag = 'scoped memory for tpu_custom_call.1']
    %8 = vsyncpa [#allocation3], 0
    %s9 = scalar_lea.sflag [#allocation3], 1
    %10 = vsyncpa %s9, 0
    loop: start=0, step=1, limit=4
    $region2: #{tpu_custom_call.1} parent=1 // loop_pre_header
      _
    $region3: #{tpu_custom_call.1} parent=1 // loop_header
      %s12 = sphi 0, %s16
      %p13 = scmp.ge.s32.totalorder %s12, 4
      %s19 = sphi 0, %s38
      %s20 = sphi 0, %s34
      %s21 = sphi 0, %s30
      %s22 = sphi 0, %s19
      %s23 = sphi 0, %s20
      %s24 = sphi 0, %s21
      %s25 = sphi 0, %s22
      %s26 = sphi 0, %s23
      %s27 = sphi 0, %s24
      %s43 = sphi 0, %s45
      %s46 = sphi 0, %s43
      %s47 = sphi 0, %s46
      %s63 = sphi 0, %s47
      %s71 = sphi 0, %s73
      %s74 = sphi 0, %s71
      %s75 = sphi 0, %s74
      %s91 = sphi 0, %s75
      %s101 = sphi 0, %s103
      %s104 = sphi 0, %s101
      %s105 = sphi 0, %s104
      %s121 = sphi 0, %s105
      %s131 = sphi 0, %s133
      %s134 = sphi 0, %s131
      %s135 = sphi 0, %s134
      %s151 = sphi 0, %s135
    $region4: #{tpu_custom_call.1} parent=1 // loop_header_branch
      %15 = sbr.rel (%p13) target = $region8
    $region5: #{tpu_custom_call.1} parent=1 // loop_body
      %s17 = ssub.s32 %s12, 1
      %s18 = ssub.s32 %s12, 2
      %s28 = sadd.s32 1, %s21
      %p29 = scmp.ge.s32.totalorder %s28, 1
      %s30 = scalar_select %p29, 0, %s28
      %s31 = sadd.s32 1, %s20
      %s32 = scalar_select %p29, %s31, %s20
      %p33 = scmp.ge.s32.totalorder %s32, 1
      %s34 = scalar_select %p33, 0, %s32
      %s35 = sadd.s32 1, %s19
      %s36 = scalar_select %p33, %s35, %s19
      %p37 = scmp.ge.s32.totalorder %s36, 2
      %s38 = scalar_select %p37, 0, %s36
      %s39 = ssub.s32 %s19, %s38
      %s40 = ssub.s32 %s20, %s34
      %s41 = sor.u32 %s39, %s40
      %p42 = scmp.eq.s32.totalorder %s41, 0
      %s44 = sadd.s32 %s43, 1
      %s45 = scalar_select %p42, %s43, %s44
      %p48 = pneg %p42
      %p49 = scmp.eq.s32.totalorder %s12, 1
      %p50 = por %p48, %p49
      %p51 = scmp.ne.s32.totalorder %s43, %s46
      %p52 = scmp.eq.s32.totalorder %s12, 0
      %p53 = por %p51, %p52
      %p54 = scmp.ne.s32.totalorder %s43, %s46
      %p55 = scmp.eq.s32.totalorder %s17, 1
      %p56 = por %p54, %p55
      %p57 = scmp.ne.s32.totalorder %s46, %s47
      %p58 = scmp.eq.s32.totalorder %s17, 0
      %p59 = por %p57, %p58
      %p60 = scmp.ne.s32.totalorder %s46, %s47
      %p61 = scmp.eq.s32.totalorder %s18, 1
      %p62 = por %p60, %p61
      %p64 = scmp.ne.s32.totalorder %s47, %s63
      %p65 = scmp.eq.s32.totalorder %s18, 0
      %p66 = por %p64, %p65
      %s67 = ssub.s32 %s19, %s38
      %s68 = ssub.s32 %s20, %s34
      %s69 = sor.u32 %s67, %s68
      %p70 = scmp.eq.s32.totalorder %s69, 0
      %s72 = sadd.s32 %s71, 1
      %s73 = scalar_select %p70, %s71, %s72
      %p76 = pneg %p70
      %p77 = scmp.eq.s32.totalorder %s12, 1
      %p78 = por %p76, %p77
      %p79 = scmp.ne.s32.totalorder %s71, %s74
      %p80 = scmp.eq.s32.totalorder %s12, 0
      %p81 = por %p79, %p80
      %p82 = scmp.ne.s32.totalorder %s71, %s74
      %p83 = scmp.eq.s32.totalorder %s17, 1
      %p84 = por %p82, %p83
      %p85 = scmp.ne.s32.totalorder %s74, %s75
      %p86 = scmp.eq.s32.totalorder %s17, 0
      %p87 = por %p85, %p86
      %p88 = scmp.ne.s32.totalorder %s74, %s75
      %p89 = scmp.eq.s32.totalorder %s18, 1
      %p90 = por %p88, %p89
      %p92 = scmp.ne.s32.totalorder %s75, %s91
      %p93 = scmp.eq.s32.totalorder %s18, 0
      %p94 = por %p92, %p93
      %s95 = ssub.s32 %s19, %s38
      %s96 = ssub.s32 %s20, %s34
      %s97 = sor.u32 %s95, %s96
      %s98 = ssub.s32 %s21, %s30
      %s99 = sor.u32 %s97, %s98
      %p100 = scmp.eq.s32.totalorder %s99, 0
      %s102 = sadd.s32 %s101, 1
      %s103 = scalar_select %p100, %s101, %s102
      %p106 = pneg %p100
      %p107 = scmp.eq.s32.totalorder %s12, 1
      %p108 = por %p106, %p107
      %p109 = scmp.ne.s32.totalorder %s101, %s104
      %p110 = scmp.eq.s32.totalorder %s12, 0
      %p111 = por %p109, %p110
      %p112 = scmp.ne.s32.totalorder %s101, %s104
      %p113 = scmp.eq.s32.totalorder %s17, 1
      %p114 = por %p112, %p113
      %p115 = scmp.ne.s32.totalorder %s104, %s105
      %p116 = scmp.eq.s32.totalorder %s17, 0
      %p117 = por %p115, %p116
      %p118 = scmp.ne.s32.totalorder %s104, %s105
      %p119 = scmp.eq.s32.totalorder %s18, 1
      %p120 = por %p118, %p119
      %p122 = scmp.ne.s32.totalorder %s105, %s121
      %p123 = scmp.eq.s32.totalorder %s18, 0
      %p124 = por %p122, %p123
      %s125 = ssub.s32 %s19, %s38
      %s126 = ssub.s32 %s20, %s34
      %s127 = sor.u32 %s125, %s126
      %s128 = ssub.s32 %s21, %s30
      %s129 = sor.u32 %s127, %s128
      %p130 = scmp.eq.s32.totalorder %s129, 0
      %s132 = sadd.s32 %s131, 1
      %s133 = scalar_select %p130, %s131, %s132
      %p136 = pneg %p130
      %p137 = scmp.eq.s32.totalorder %s12, 1
      %p138 = por %p136, %p137
      %p139 = scmp.ne.s32.totalorder %s131, %s134
      %p140 = scmp.eq.s32.totalorder %s12, 0
      %p141 = por %p139, %p140
      %p142 = scmp.ne.s32.totalorder %s131, %s134
      %p143 = scmp.eq.s32.totalorder %s17, 1
      %p144 = por %p142, %p143
      %p145 = scmp.ne.s32.totalorder %s134, %s135
      %p146 = scmp.eq.s32.totalorder %s17, 0
      %p147 = por %p145, %p146
      %p148 = scmp.ne.s32.totalorder %s134, %s135
      %p149 = scmp.eq.s32.totalorder %s18, 1
      %p150 = por %p148, %p149
      %p152 = scmp.ne.s32.totalorder %s135, %s151
      %p153 = scmp.eq.s32.totalorder %s18, 0
      %p154 = por %p152, %p153
      %p155 = scmp.le.s32.totalorder 1, %s12
      %p156 = scmp.lt.s32.totalorder %s12, 3
      %p157 = pnand %p155, %p156
      %p158 = pneg %p157
      // Predicated region
      $region9: #{tpu_custom_call.1} parent=5 // pred_check
        _
      $region10: #{tpu_custom_call.1} parent=5 // pred_check_branch
        %160 = sbr.rel (%p157) target = $region12
      $region11: #{tpu_custom_call.1} parent=5 // pred_region
        %s161 = ssub.s32 %s12, 1
      $region12: #{tpu_custom_call.1} parent=5 // pred_fallthru
        _
      %p162 = scmp.lt.s32.totalorder %s12, 2
      // Predicated region
      $region13: #{tpu_custom_call.1} parent=5 // pred_check
        %p163 = pneg %p162
      $region14: #{tpu_custom_call.1} parent=5 // pred_check_branch
        %165 = sbr.rel (%p163) target = $region16
      $region15: #{tpu_custom_call.1} parent=5 // pred_region
        // Predicated region
        $region17: #{tpu_custom_call.1} parent=15 // pred_check
          %p166 = pneg %p53
        $region18: #{tpu_custom_call.1} parent=15 // pred_check_branch
          %168 = sbr.rel (%p166) target = $region20
        $region19: #{tpu_custom_call.1} parent=15 // pred_region
          %p169 = scmp.lt.s32.totalorder %s19, 1
          %s170 = scalar_select %p169, %s19, 1
          %p171 = scmp.lt.s32.totalorder %s20, 0
          %s172 = scalar_select %p171, %s20, 0
          %s173 = sadd.s32 %s172, %s170
          %s174 = smul.addr %s173, 4
          %s175 = scalar_lea.vmem %s0, %s174
        $region20: #{tpu_custom_call.1} parent=15 // pred_fallthru
          _
        // Predicated region
        $region21: #{tpu_custom_call.1} parent=15 // pred_check
          %p176 = pneg %p81
        $region22: #{tpu_custom_call.1} parent=15 // pred_check_branch
          %178 = sbr.rel (%p176) target = $region24
        $region23: #{tpu_custom_call.1} parent=15 // pred_region
          %p179 = scmp.lt.s32.totalorder %s19, 1
          %s180 = scalar_select %p179, %s19, 1
          %p181 = scmp.lt.s32.totalorder %s20, 0
          %s182 = scalar_select %p181, %s20, 0
          %s183 = sadd.s32 %s182, %s180
          %s184 = smul.addr %s183, 4
          %s185 = scalar_lea.vmem %s1, %s184
        $region24: #{tpu_custom_call.1} parent=15 // pred_fallthru
          _
        // Predicated region
        $region25: #{tpu_custom_call.1} parent=15 // pred_check
          %p186 = pneg %p111
        $region26: #{tpu_custom_call.1} parent=15 // pred_check_branch
          %188 = sbr.rel (%p186) target = $region28
        $region27: #{tpu_custom_call.1} parent=15 // pred_region
          %p189 = scmp.lt.s32.totalorder %s19, 1
          %s190 = scalar_select %p189, %s19, 1
          %p191 = scmp.lt.s32.totalorder %s20, 0
          %s192 = scalar_select %p191, %s20, 0
          %p193 = scmp.lt.s32.totalorder %s21, 0
          %s194 = scalar_select %p193, %s21, 0
          %s195 = sadd.s32 %s194, %s192
          %s196 = sadd.s32 %s195, %s190
          %s197 = smul.addr %s196, 4
          %s198 = scalar_lea.vmem %s2, %s197
        $region28: #{tpu_custom_call.1} parent=15 // pred_fallthru
          _
      $region16: #{tpu_custom_call.1} parent=5 // pred_fallthru
        _
      %p199 = scmp.le.s32.totalorder 1, %s12
      %p200 = scmp.lt.s32.totalorder %s12, 3
      %p201 = pnand %p199, %p200
      %p202 = pneg %p201
      // Predicated region
      $region29: #{tpu_custom_call.1} parent=5 // pred_check
        _
      $region30: #{tpu_custom_call.1} parent=5 // pred_check_branch
        %204 = sbr.rel (%p201) target = $region32
      $region31: #{tpu_custom_call.1} parent=5 // pred_region
        %s205 = ssub.s32 %s12, 1
        %p206 = scmp.lt.s32.totalorder %s22, 1
        %s207 = scalar_select %p206, %s22, 1
        %p208 = scmp.lt.s32.totalorder %s23, 0
        %s209 = scalar_select %p208, %s23, 0
        %s210 = sadd.s32 %s209, %s207
        %s211 = smul.addr %s210, 4
        %s212 = scalar_lea.vmem %s0, %s211
        %p213 = pneg %p59
        %p214 = pneg %p56
        %p215 = scmp.lt.s32.totalorder %s22, 1
        %s216 = scalar_select %p215, %s22, 1
        %p217 = scmp.lt.s32.totalorder %s23, 0
        %s218 = scalar_select %p217, %s23, 0
        %s219 = sadd.s32 %s218, %s216
        %s220 = smul.addr %s219, 4
        %s221 = scalar_lea.vmem %s1, %s220
        %p222 = pneg %p87
        %p223 = pneg %p84
        %p224 = scmp.lt.s32.totalorder %s22, 1
        %s225 = scalar_select %p224, %s22, 1
        %p226 = scmp.lt.s32.totalorder %s23, 0
        %s227 = scalar_select %p226, %s23, 0
        %p228 = scmp.lt.s32.totalorder %s24, 0
        %s229 = scalar_select %p228, %s24, 0
        %s230 = sadd.s32 %s229, %s227
        %s231 = sadd.s32 %s230, %s225
        %s232 = smul.addr %s231, 4
        %s233 = scalar_lea.vmem %s2, %s232
        %p234 = pneg %p117
        %p235 = pneg %p114
        %p236 = pneg %p147
        %p237 = pneg %p144
        %s238 = sand.u32 %s134, 1
        %s239 = scalar_lea.sflag [#allocation3], %s238
        %s240 = sand.u32 %s134, 1
        %s241 = smul.addr %s240, 4
        %s242 = scalar_lea.vmem [#allocation2], %s241
        %p243 = scmp.lt.s32.totalorder %s22, 1
        %s244 = scalar_select %p243, %s22, 1
        %p245 = scmp.lt.s32.totalorder %s23, 0
        %s246 = scalar_select %p245, %s23, 0
        %s247 = sadd.s32 %s246, %s244
        %s248 = smul.addr %s247, 4
        %s249 = scalar_lea.vmem %s0, %s248
        %p250 = scmp.lt.s32.totalorder %s22, 1
        %s251 = scalar_select %p250, %s22, 1
        %p252 = scmp.lt.s32.totalorder %s23, 0
        %s253 = scalar_select %p252, %s23, 0
        %s254 = sadd.s32 %s253, %s251
        %s255 = smul.addr %s254, 4
        %s256 = scalar_lea.vmem %s1, %s255
        %p257 = scmp.lt.s32.totalorder %s22, 1
        %s258 = scalar_select %p257, %s22, 1
        %p259 = scmp.lt.s32.totalorder %s23, 0
        %s260 = scalar_select %p259, %s23, 0
        %p261 = scmp.lt.s32.totalorder %s24, 0
        %s262 = scalar_select %p261, %s24, 0
        %s263 = sadd.s32 %s262, %s260
        %s264 = sadd.s32 %s263, %s258
        %s265 = smul.addr %s264, 4
        %s266 = scalar_lea.vmem %s2, %s265
        %v267 = vld [vmem:[%s266] sm:$0xf]
        %v268 = vld [vmem:[%s249] sm:$0xf]
        %270 = vset.pattern.permute.xlu0 0
        %271 = vperm.xlu0 %270, %v268
        %v272 = vpop.permute.xlu0 %271
        %v274 = vmul.f32 %v267, %v272
        %v275 = vld [vmem:[%s256] sm:$0xf]
        %277 = vset.pattern.permute.xlu0 0
        %278 = vperm.xlu0 %277, %v275
        %v279 = vpop.permute.xlu0 %278
        %v281 = vadd.f32 %v274, %v279
        %vm282 = vcmask 125952
        %283 = vst.msk [vmem:[%s242] sm:$0xf] %vm282, %v281
        %s284 = sand.u32 %s134, 1
        %s285 = scalar_lea.sflag [#allocation3], %s284
        %s286 = sand.u32 %s134, 1
        %s287 = smul.addr %s286, 4
        %s288 = scalar_lea.vmem [#allocation2], %s287
        // Predicated region
        $region33: #{tpu_custom_call.1} parent=31 // pred_check
          %p289 = pneg %p144
        $region34: #{tpu_custom_call.1} parent=31 // pred_check_branch
          %291 = sbr.rel (%p289) target = $region36
        $region35: #{tpu_custom_call.1} parent=31 // pred_region
          %293 = vsyncadd %s285, 0
          %s294 = sadd.s32 %s24, %s23
          %s295 = sadd.s32 %s294, %s22
          %s296 = smul.addr %s295, 4
          %s297 = scalar_lea.hbm %s3, %s296
          %s299 = sshll.u32 %s288, 4
          %s300 = int_to_ptr.vmem [resolvable:$true] %s299
          %s301 = sshll.u32 %s297, 4
          %s302 = int_to_ptr.hbm [resolvable:$true] %s301
          %304 = dma.vmem_to_hbm [thread:$0]  %s300, 64, %s302, %s285
        $region36: #{tpu_custom_call.1} parent=31 // pred_fallthru
          _
      $region32: #{tpu_custom_call.1} parent=5 // pred_fallthru
        _
      %p305 = scmp.le.s32.totalorder 2, %s12
      // Predicated region
      $region37: #{tpu_custom_call.1} parent=5 // pred_check
        %p306 = pneg %p305
      $region38: #{tpu_custom_call.1} parent=5 // pred_check_branch
        %308 = sbr.rel (%p306) target = $region40
      $region39: #{tpu_custom_call.1} parent=5 // pred_region
        %s309 = ssub.s32 %s12, 2
        // Predicated region
        $region41: #{tpu_custom_call.1} parent=39 // pred_check
          %p310 = pneg %p150
        $region42: #{tpu_custom_call.1} parent=39 // pred_check_branch
          %312 = sbr.rel (%p310) target = $region44
        $region43: #{tpu_custom_call.1} parent=39 // pred_region
          %s313 = sand.u32 %s135, 1
          %s314 = scalar_lea.sflag [#allocation3], %s313
          %s315 = sand.u32 %s135, 1
          %s316 = smul.addr %s315, 4
          %s317 = scalar_lea.vmem [#allocation2], %s316
          %319 = dma.done %s314, 64
        $region44: #{tpu_custom_call.1} parent=39 // pred_fallthru
          _
      $region40: #{tpu_custom_call.1} parent=5 // pred_fallthru
        _
    $region6: #{tpu_custom_call.1} parent=1 // loop_footer
      %s16 = sadd.s32 1, %s12
    $region7: #{tpu_custom_call.1} parent=1 // loop_footer_branch
      %11 = sbr.rel target = $region3
    $region8: #{tpu_custom_call.1} parent=1 // loop_exit
      _
    %320 = vsyncpa [#allocation3], 1
    %s321 = scalar_lea.sflag [#allocation3], 1
    %322 = vsyncpa %s321, 1

</llo_original>
